<compile_context>
chip_gen: v6e
topology: v6e:2x2x1
jax: 0.10.0
libtpu: 0.0.40
codegen_flags: <defaults>
</compile_context>

<pallas_src>
import jax
import jax.numpy as jnp
from jax import lax
from jax.experimental import pallas as pl
from jax.experimental.pallas import tpu as pltpu


def _policy_kernel(scale_ref, x_ref, w1_ref, b1_ref, w2_ref, b2_ref,
                   w3_ref, b3_ref, out_ref):
    # x_ref : [TB, S] f32 (streamed)      w1: [H, S] bf16   b1: [H, 1] f32
    # w2    : [H, H] bf16  b2: [H, 1]     w3: [A, H] bf16   b3: [A, 1]
    # out   : [A, TB] f32  (batch on the 128-lane axis -> lane-dense stores)
    x = x_ref[...].astype(jnp.bfloat16)

    # h1^T = W1 @ x^T: contract the S axis of both operands; no materialized
    # transpose (the MXU consumes the RHS in transposed form).
    h1 = lax.dot_general(w1_ref[...], x, (((1,), (1,)), ((), ())),
                         preferred_element_type=jnp.float32)
    h1 = jnp.maximum(h1 + b1_ref[...], 0.0)                    # [H, TB] f32

    h2 = jnp.dot(w2_ref[...], h1.astype(jnp.bfloat16),
                 preferred_element_type=jnp.float32)
    h2 = jnp.maximum(h2 + b2_ref[...], 0.0)                    # [H, TB] f32

    a = jnp.dot(w3_ref[...], h2.astype(jnp.bfloat16),
                preferred_element_type=jnp.float32) + b3_ref[...]   # [A, TB] f32

    out_ref[...] = (scale_ref[0, 0] * jnp.tanh(a)).astype(out_ref.dtype)


def policy_forward(state, params, max_action, *, block_b=8192,
                   return_transposed=False):
    """state: [B, state_dim] f32; params in PyTorch layout (W [out,in], b [out]).

    Returns [B, action_dim] (or [action_dim, B] if return_transposed=True).
    """
    w1, b1 = params["w1"], params["b1"]     # [H, S], [H]
    w2, b2 = params["w2"], params["b2"]     # [H, H], [H]
    w3, b3 = params["w3"], params["b3"]     # [A, H], [A]

    B, S = state.shape
    H = w1.shape[0]
    A = w3.shape[0]

    # Batch tile: multiple of 128 lanes, capped at block_b, no larger than needed.
    TB = min(block_b, max(128, pl.cdiv(B, 128) * 128))
    n_tiles = pl.cdiv(B, TB)          # ragged last block handled by Pallas

    b1c = b1.reshape(H, 1).astype(jnp.float32)
    b2c = b2.reshape(H, 1).astype(jnp.float32)
    b3c = b3.reshape(A, 1).astype(jnp.float32)
    scale = jnp.full((1, 1), max_action, jnp.float32)

    flops = 2 * B * (S * H + H * H + H * A)
    bytes_accessed = (4 * (B * S + B * A + 2 * H + A)          # f32 acts + biases
                      + 2 * (H * S + H * H + A * H))           # bf16 weights
    cost = pl.CostEstimate(flops=flops, transcendentals=B * A,
                           bytes_accessed=bytes_accessed)

    out_t = pl.pallas_call(
        _policy_kernel,
        out_shape=jax.ShapeDtypeStruct((A, B), jnp.float32),
        grid=(n_tiles,),
        in_specs=[
            pl.BlockSpec((1, 1), lambda i: (0, 0),
                         memory_space=pltpu.MemorySpace.SMEM),   # max_action
            pl.BlockSpec((TB, S), lambda i: (i, 0)),             # state: streamed
            pl.BlockSpec((H, S), lambda i: (0, 0)),              # w1: resident
            pl.BlockSpec((H, 1), lambda i: (0, 0)),              # b1
            pl.BlockSpec((H, H), lambda i: (0, 0)),              # w2
            pl.BlockSpec((H, 1), lambda i: (0, 0)),              # b2
            pl.BlockSpec((A, H), lambda i: (0, 0)),              # w3
            pl.BlockSpec((A, 1), lambda i: (0, 0)),              # b3
        ],
        out_specs=pl.BlockSpec((A, TB), lambda i: (0, i)),
        compiler_params=pltpu.CompilerParams(
            dimension_semantics=("parallel",)),
        cost_estimate=cost,
    )(scale, state.astype(jnp.float32),
      w1.astype(jnp.bfloat16), b1c,
      w2.astype(jnp.bfloat16), b2c,
      w3.astype(jnp.bfloat16), b3c)

    if return_transposed:
        return out_t            # [A, B] (lane-dense, no extra HBM pass)
    return out_t.T              # [B, A] (PyTorch-shaped)


def init_params(key, state_dim, action_dim, hidden=32):
    """Deterministic synthetic init, PyTorch nn.Linear layout: W [out, in], b [out]."""
    ks = jax.random.split(key, 6)

    def lin(kw, kb, fan_in, fan_out):
        bound = 1.0 / jnp.sqrt(fan_in)
        w = jax.random.uniform(kw, (fan_out, fan_in), jnp.float32, -bound, bound)
        b = jax.random.uniform(kb, (fan_out,), jnp.float32, -bound, bound)
        return w, b

    w1, b1 = lin(ks[0], ks[1], state_dim, hidden)
    w2, b2 = lin(ks[2], ks[3], hidden, hidden)
    w3, b3 = lin(ks[4], ks[5], hidden, action_dim)
    return {"w1": w1, "b1": b1, "w2": w2, "b2": b2, "w3": w3, "b3": b3}


if __name__ == "__main__":
    key = jax.random.PRNGKey(0)
    k_state, k_params = jax.random.split(key)

    batch = 2
    state_dim = 16
    action_dim = 8
    max_action = 2.0

    state = jax.random.normal(k_state, (batch, state_dim), jnp.float32)
    params = init_params(k_params, state_dim, action_dim)

    out = policy_forward(state, params, max_action)
    out = jax.block_until_ready(out)
    assert out.shape == (batch, action_dim)

    # Reference 1: same numerics as the kernel (bf16 MXU operands, f32 accum).
    def ref_bf16(x):
        h1 = lax.dot_general(x.astype(jnp.bfloat16),
                             params["w1"].astype(jnp.bfloat16),
                             (((1,), (1,)), ((), ())),
                             preferred_element_type=jnp.float32) + params["b1"]
        h1 = jnp.maximum(h1, 0.0)
        h2 = jnp.dot(h1.astype(jnp.bfloat16),
                     params["w2"].astype(jnp.bfloat16).T,
                     preferred_element_type=jnp.float32) + params["b2"]
        h2 = jnp.maximum(h2, 0.0)
        a = jnp.dot(h2.astype(jnp.bfloat16),
                    params["w3"].astype(jnp.bfloat16).T,
                    preferred_element_type=jnp.float32) + params["b3"]
        return max_action * jnp.tanh(a)

    ref_b = ref_bf16(state)
    assert jnp.allclose(out, ref_b, atol=1e-4, rtol=1e-4), (
        f"bf16-ref max abs err = {jnp.max(jnp.abs(out - ref_b))}")

    # Reference 2: full-f32 PyTorch semantics (loose tolerance for bf16 operands).
    h1 = jnp.maximum(state @ params["w1"].T + params["b1"], 0.0)
    h2 = jnp.maximum(h1 @ params["w2"].T + params["b2"], 0.0)
    ref_f32 = max_action * jnp.tanh(h2 @ params["w3"].T + params["b3"])
    assert jnp.allclose(out, ref_f32, atol=5e-2, rtol=5e-2), (
        f"f32-ref max abs err = {jnp.max(jnp.abs(out - ref_f32))}")

    print("KERNEL_OK")
</pallas_src>

<mosaic_0001>
module attributes {stable_mosaic.version = 11 : i64} {
  func.func @_policy_kernel(%arg0: i32, %arg1: memref<1x1xf32, #tpu.memory_space<smem>>, %arg2: memref<128x16xf32, #tpu.memory_space<vmem>>, %arg3: memref<32x16xbf16, #tpu.memory_space<vmem>>, %arg4: memref<32x1xf32, #tpu.memory_space<vmem>>, %arg5: memref<32x32xbf16, #tpu.memory_space<vmem>>, %arg6: memref<32x1xf32, #tpu.memory_space<vmem>>, %arg7: memref<8x32xbf16, #tpu.memory_space<vmem>>, %arg8: memref<8x1xf32, #tpu.memory_space<vmem>>, %arg9: memref<8x128xf32, #tpu.memory_space<vmem>>) attributes {dimension_semantics = [#tpu.dimension_semantics<parallel>], iteration_bounds = array<i64: 1>, scalar_prefetch = 0 : i64, scratch_operands = 0 : i64, tpu.core_type = #tpu.core_type<tc>, window_params = [{transform_indices = @transform_0, window_bounds = array<i64: 1, 1>}, {transform_indices = @transform_1, window_bounds = array<i64: 128, 16>}, {pipeline_mode = #tpu.pipeline_mode<synchronous>, transform_indices = @transform_2, window_bounds = array<i64: 32, 16>}, {pipeline_mode = #tpu.pipeline_mode<synchronous>, transform_indices = @transform_3, window_bounds = array<i64: 32, 1>}, {pipeline_mode = #tpu.pipeline_mode<synchronous>, transform_indices = @transform_4, window_bounds = array<i64: 32, 32>}, {pipeline_mode = #tpu.pipeline_mode<synchronous>, transform_indices = @transform_5, window_bounds = array<i64: 32, 1>}, {pipeline_mode = #tpu.pipeline_mode<synchronous>, transform_indices = @transform_6, window_bounds = array<i64: 8, 32>}, {pipeline_mode = #tpu.pipeline_mode<synchronous>, transform_indices = @transform_7, window_bounds = array<i64: 8, 1>}, {transform_indices = @transform_8, window_bounds = array<i64: 8, 128>}]} {
    %c0 = arith.constant 0 : index
    %c0_0 = arith.constant 0 : index
    %0 = vector.load %arg2[%c0, %c0_0] : memref<128x16xf32, #tpu.memory_space<vmem>>, vector<128x16xf32>
    %1 = arith.truncf %0 : vector<128x16xf32> to vector<128x16xbf16>
    %c0_1 = arith.constant 0 : index
    %c0_2 = arith.constant 0 : index
    %2 = vector.load %arg3[%c0_1, %c0_2] : memref<32x16xbf16, #tpu.memory_space<vmem>>, vector<32x16xbf16>
    %cst = arith.constant dense<0.000000e+00> : vector<32x128xf32>
    %3 = tpu.matmul %2, %1, %cst {dimension_numbers = #tpu.dot_dimension_numbers<[1], [1], [0], [0], [0, 0, 1, 0], [], []>} : vector<32x16xbf16>, vector<128x16xbf16>, vector<32x128xf32> -> vector<32x128xf32>
    %c0_3 = arith.constant 0 : index
    %c0_4 = arith.constant 0 : index
    %4 = vector.load %arg4[%c0_3, %c0_4] : memref<32x1xf32, #tpu.memory_space<vmem>>, vector<32x1xf32>
    %5 = vector.broadcast %4 : vector<32x1xf32> to vector<32x128xf32>
    %6 = arith.addf %3, %5 : vector<32x128xf32>
    %cst_5 = arith.constant 0.000000e+00 : f32
    %7 = vector.broadcast %cst_5 : f32 to vector<32x128xf32>
    %8 = arith.maximumf %6, %7 : vector<32x128xf32>
    %c0_6 = arith.constant 0 : index
    %c0_7 = arith.constant 0 : index
    %9 = vector.load %arg5[%c0_6, %c0_7] : memref<32x32xbf16, #tpu.memory_space<vmem>>, vector<32x32xbf16>
    %10 = arith.truncf %8 : vector<32x128xf32> to vector<32x128xbf16>
    %cst_8 = arith.constant dense<0.000000e+00> : vector<32x128xf32>
    %11 = tpu.matmul %9, %10, %cst_8 {dimension_numbers = #tpu.dot_dimension_numbers<[1], [0], [0], [1], [0, 0, 1, 1], [], []>} : vector<32x32xbf16>, vector<32x128xbf16>, vector<32x128xf32> -> vector<32x128xf32>
    %c0_9 = arith.constant 0 : index
    %c0_10 = arith.constant 0 : index
    %12 = vector.load %arg6[%c0_9, %c0_10] : memref<32x1xf32, #tpu.memory_space<vmem>>, vector<32x1xf32>
    %13 = vector.broadcast %12 : vector<32x1xf32> to vector<32x128xf32>
    %14 = arith.addf %11, %13 : vector<32x128xf32>
    %cst_11 = arith.constant 0.000000e+00 : f32
    %15 = vector.broadcast %cst_11 : f32 to vector<32x128xf32>
    %16 = arith.maximumf %14, %15 : vector<32x128xf32>
    %c0_12 = arith.constant 0 : index
    %c0_13 = arith.constant 0 : index
    %17 = vector.load %arg7[%c0_12, %c0_13] : memref<8x32xbf16, #tpu.memory_space<vmem>>, vector<8x32xbf16>
    %18 = arith.truncf %16 : vector<32x128xf32> to vector<32x128xbf16>
    %cst_14 = arith.constant dense<0.000000e+00> : vector<8x128xf32>
    %19 = tpu.matmul %17, %18, %cst_14 {dimension_numbers = #tpu.dot_dimension_numbers<[1], [0], [0], [1], [0, 0, 1, 1], [], []>} : vector<8x32xbf16>, vector<32x128xbf16>, vector<8x128xf32> -> vector<8x128xf32>
    %c0_15 = arith.constant 0 : index
    %c0_16 = arith.constant 0 : index
    %20 = vector.load %arg8[%c0_15, %c0_16] : memref<8x1xf32, #tpu.memory_space<vmem>>, vector<8x1xf32>
    %21 = vector.broadcast %20 : vector<8x1xf32> to vector<8x128xf32>
    %22 = arith.addf %19, %21 : vector<8x128xf32>
    %c0_17 = arith.constant 0 : index
    %c0_18 = arith.constant 0 : index
    %23 = memref.load %arg1[%c0_17, %c0_18] : memref<1x1xf32, #tpu.memory_space<smem>>
    %24 = math.tanh %22 : vector<8x128xf32>
    %25 = vector.broadcast %23 : f32 to vector<8x128xf32>
    %26 = arith.mulf %25, %24 : vector<8x128xf32>
    %c0_19 = arith.constant 0 : index
    %c0_20 = arith.constant 0 : index
    %27 = vector.load %arg9[%c0_19, %c0_20] : memref<8x128xf32, #tpu.memory_space<vmem>>, vector<8x128xf32>
    tpu.vector_store %arg9[%c0_19, %c0_20], %26 {strides = array<i32>} : memref<8x128xf32, #tpu.memory_space<vmem>>, vector<8x128xf32>,
    return
  }
  func.func @transform_0(%arg0: i32) -> (i32, i32) {
    %c0_i32 = arith.constant 0 : i32
    %c0_i32_0 = arith.constant 0 : i32
    %c0_i32_1 = arith.constant 0 : i32
    return %c0_i32, %c0_i32_0 : i32, i32
  }
  func.func @transform_1(%arg0: i32) -> (i32, i32) {
    %c0_i32 = arith.constant 0 : i32
    %c0_i32_0 = arith.constant 0 : i32
    return %arg0, %c0_i32 : i32, i32
  }
  func.func @transform_2(%arg0: i32) -> (i32, i32) {
    %c0_i32 = arith.constant 0 : i32
    %c0_i32_0 = arith.constant 0 : i32
    %c0_i32_1 = arith.constant 0 : i32
    return %c0_i32, %c0_i32_0 : i32, i32
  }
  func.func @transform_3(%arg0: i32) -> (i32, i32) {
    %c0_i32 = arith.constant 0 : i32
    %c0_i32_0 = arith.constant 0 : i32
    %c0_i32_1 = arith.constant 0 : i32
    return %c0_i32, %c0_i32_0 : i32, i32
  }
  func.func @transform_4(%arg0: i32) -> (i32, i32) {
    %c0_i32 = arith.constant 0 : i32
    %c0_i32_0 = arith.constant 0 : i32
    %c0_i32_1 = arith.constant 0 : i32
    return %c0_i32, %c0_i32_0 : i32, i32
  }
  func.func @transform_5(%arg0: i32) -> (i32, i32) {
    %c0_i32 = arith.constant 0 : i32
    %c0_i32_0 = arith.constant 0 : i32
    %c0_i32_1 = arith.constant 0 : i32
    return %c0_i32, %c0_i32_0 : i32, i32
  }
  func.func @transform_6(%arg0: i32) -> (i32, i32) {
    %c0_i32 = arith.constant 0 : i32
    %c0_i32_0 = arith.constant 0 : i32
    %c0_i32_1 = arith.constant 0 : i32
    return %c0_i32, %c0_i32_0 : i32, i32
  }
  func.func @transform_7(%arg0: i32) -> (i32, i32) {
    %c0_i32 = arith.constant 0 : i32
    %c0_i32_0 = arith.constant 0 : i32
    %c0_i32_1 = arith.constant 0 : i32
    return %c0_i32, %c0_i32_0 : i32, i32
  }
  func.func @transform_8(%arg0: i32) -> (i32, i32) {
    %c0_i32 = arith.constant 0 : i32
    %c0_i32_0 = arith.constant 0 : i32
    return %c0_i32, %arg0 : i32, i32
  }
}

</mosaic_0001>

<llo_original>
// kernel: tpu_custom_call.1
$region0: #{tpu_custom_call.1}
  #allocation0 [shape = 'u32[]', space=smem, size = 0x4, offset = 0x4, fixed_abs, tag = 'smem constant byte address 0x4 - core index']
  #allocation1 [shape = 'u32[144,128]{1,0:T(1,128)}', space=vmem, size = 0x12000, scoped, tag = 'internal scratch']
  #allocation2 [shape = 'f32[1,1]{1,0:T(1,128)S(6)}', space=smem, size = 0x200, scoped, tag = 'scoped memory for tpu_custom_call.1']
  %s0 = inlined_call_operand.<no memory space> [shape: f32[1,1], index: 0, kind: input, shape index: {}]
  %s1 = inlined_call_operand.vmem [shape: f32[2,16], index: 1, kind: input, shape index: {}]
  %s2 = inlined_call_operand.vmem [shape: bf16[32,16], index: 2, kind: input, shape index: {}]
  %s3 = inlined_call_operand.vmem [shape: f32[32,1], index: 3, kind: input, shape index: {}]
  %s4 = inlined_call_operand.vmem [shape: bf16[32,32], index: 4, kind: input, shape index: {}]
  %s5 = inlined_call_operand.vmem [shape: f32[32,1], index: 5, kind: input, shape index: {}]
  %s6 = inlined_call_operand.vmem [shape: bf16[8,32], index: 6, kind: input, shape index: {}]
  %s7 = inlined_call_operand.vmem [shape: f32[8,1], index: 7, kind: input, shape index: {}]
  %s8 = inlined_call_operand.vmem [shape: f32[8,2], index: 8, kind: output, shape index: {}]
  %s9 = sld [smem:[#allocation0]]
  $region42: #{tpu_custom_call.1} parent=0
    _
  %s11 = ssub.s32 1, %s9
  %s12 = scalar_select 0, %s11, %s9
  %13 = sst [smem:[#allocation2]] %s0
  // Predicated region
  $region2: #{tpu_custom_call.1} parent=0 // pred_check
    _
  $region3: #{tpu_custom_call.1} parent=0 // pred_check_branch
    %15 = sbr.rel (0) target = $region5
  $region4: #{tpu_custom_call.1} parent=0 // pred_region
    _
  $region5: #{tpu_custom_call.1} parent=0 // pred_fallthru
    _
  // Predicated region
  $region6: #{tpu_custom_call.1} parent=0 // pred_check
    _
  $region7: #{tpu_custom_call.1} parent=0 // pred_check_branch
    %17 = sbr.rel (0) target = $region9
  $region8: #{tpu_custom_call.1} parent=0 // pred_region
    _
  $region9: #{tpu_custom_call.1} parent=0 // pred_fallthru
    _
  // Predicated region
  $region10: #{tpu_custom_call.1} parent=0 // pred_check
    _
  $region11: #{tpu_custom_call.1} parent=0 // pred_check_branch
    %19 = sbr.rel (0) target = $region13
  $region12: #{tpu_custom_call.1} parent=0 // pred_region
    _
  $region13: #{tpu_custom_call.1} parent=0 // pred_fallthru
    _
  // Predicated region
  $region14: #{tpu_custom_call.1} parent=0 // pred_check
    _
  $region15: #{tpu_custom_call.1} parent=0 // pred_check_branch
    %21 = sbr.rel (0) target = $region17
  $region16: #{tpu_custom_call.1} parent=0 // pred_region
    _
  $region17: #{tpu_custom_call.1} parent=0 // pred_fallthru
    _
  // Predicated region
  $region18: #{tpu_custom_call.1} parent=0 // pred_check
    _
  $region19: #{tpu_custom_call.1} parent=0 // pred_check_branch
    %23 = sbr.rel (0) target = $region21
  $region20: #{tpu_custom_call.1} parent=0 // pred_region
    _
  $region21: #{tpu_custom_call.1} parent=0 // pred_fallthru
    _
  // Predicated region
  $region22: #{tpu_custom_call.1} parent=0 // pred_check
    _
  $region23: #{tpu_custom_call.1} parent=0 // pred_check_branch
    %25 = sbr.rel (0) target = $region25
  $region24: #{tpu_custom_call.1} parent=0 // pred_region
    _
  $region25: #{tpu_custom_call.1} parent=0 // pred_fallthru
    _
  // Predicated region
  $region26: #{tpu_custom_call.1} parent=0 // pred_check
    _
  $region27: #{tpu_custom_call.1} parent=0 // pred_check_branch
    %27 = sbr.rel (0) target = $region29
  $region28: #{tpu_custom_call.1} parent=0 // pred_region
    _
  $region29: #{tpu_custom_call.1} parent=0 // pred_fallthru
    _
  // Predicated region
  $region30: #{tpu_custom_call.1} parent=0 // pred_check
    _
  $region31: #{tpu_custom_call.1} parent=0 // pred_check_branch
    %29 = sbr.rel (0) target = $region33
  $region32: #{tpu_custom_call.1} parent=0 // pred_region
    _
  $region33: #{tpu_custom_call.1} parent=0 // pred_fallthru
    _
  %v31 = vld [vmem:[%s1] sm:$0xff]
  %v32 = vld [vmem:[%s1 + $0x8] sm:$0xff]
  %v33 = vld [vmem:[%s1 + $0x10] sm:$0xff]
  %v34 = vld [vmem:[%s1 + $0x18] sm:$0xff]
  %v35 = vld [vmem:[%s1 + $0x20] sm:$0xff]
  %v36 = vld [vmem:[%s1 + $0x28] sm:$0xff]
  %v37 = vld [vmem:[%s1 + $0x30] sm:$0xff]
  %v38 = vld [vmem:[%s1 + $0x38] sm:$0xff]
  %v39 = vld [vmem:[%s1 + $0x40] sm:$0xff]
  %v40 = vld [vmem:[%s1 + $0x48] sm:$0xff]
  %v41 = vld [vmem:[%s1 + $0x50] sm:$0xff]
  %v42 = vld [vmem:[%s1 + $0x58] sm:$0xff]
  %v43 = vld [vmem:[%s1 + $0x60] sm:$0xff]
  %v44 = vld [vmem:[%s1 + $0x68] sm:$0xff]
  %v45 = vld [vmem:[%s1 + $0x70] sm:$0xff]
  %v46 = vld [vmem:[%s1 + $0x78] sm:$0xff]
  %v47 = vpack.c.bf16 %v32, %v31
  %v48 = vpack.c.bf16 %v34, %v33
  %v49 = vpack.c.bf16 %v36, %v35
  %v50 = vpack.c.bf16 %v38, %v37
  %v51 = vpack.c.bf16 %v40, %v39
  %v52 = vpack.c.bf16 %v42, %v41
  %v53 = vpack.c.bf16 %v44, %v43
  %v54 = vpack.c.bf16 %v46, %v45
  %v55 = vld [vmem:[%s2] sm:$0xf]
  %v56 = vld [vmem:[%s2 + $0x4] sm:$0xf]
  %v57 = vld [vmem:[%s2 + $0x8] sm:$0xf]
  %v58 = vld [vmem:[%s2 + $0xc] sm:$0xf]
  %v59 = vld [vmem:[%s3] sm:$0xff]
  %v60 = vld [vmem:[%s3 + $0x8] sm:$0xff]
  %v61 = vld [vmem:[%s3 + $0x10] sm:$0xff]
  %v62 = vld [vmem:[%s3 + $0x18] sm:$0xff]
  %64 = vset.pattern.permute.xlu0 0
  %65 = vperm.xlu0 %64, %v59
  %v66 = vpop.permute.xlu0 %65
  %69 = vset.pattern.permute.xlu0 0
  %70 = vperm.xlu0 %69, %v60
  %v71 = vpop.permute.xlu0 %70
  %74 = vset.pattern.permute.xlu0 0
  %75 = vperm.xlu0 %74, %v61
  %v76 = vpop.permute.xlu0 %75
  %79 = vset.pattern.permute.xlu0 0
  %80 = vperm.xlu0 %79, %v62
  %v81 = vpop.permute.xlu0 %80
  %v87 = vunpack.c.l.b16 %v55
  %v88 = vunpack.c.l.b16 %v56
  %v89 = vunpack.c.l.b16 %v57
  %v90 = vunpack.c.l.b16 %v58
  %v91 = vpack.c.b16 %v88, %v87
  %v92 = vpack.c.b16 %v90, %v89
  %vm93 = vcmask 130048
  %v95 = vsel %vm93, %v91, 0
  %v98 = vsel %vm93, %v92, 0
  %v101 = vsel %vm93, %v47, 0
  %v104 = vsel %vm93, %v48, 0
  %v107 = vsel %vm93, %v49, 0
  %v110 = vsel %vm93, %v50, 0
  %v113 = vsel %vm93, %v51, 0
  %v116 = vsel %vm93, %v52, 0
  %v119 = vsel %vm93, %v53, 0
  %v122 = vsel %vm93, %v54, 0
  %124 = vmatprep.subr.bf16.mxu0 0
  %125 = vmatpush1.bf16.xpose.msra.mxu0 %v122
  %126 = vmatprep.subr.bf16.mxu0 0
  %127 = vmatpush1.bf16.xpose.msra.mxu0 %v119
  %128 = vmatprep.subr.bf16.mxu0 0
  %129 = vmatpush1.bf16.xpose.msra.mxu0 %v116
  %130 = vmatprep.subr.bf16.mxu0 0
  %131 = vmatpush1.bf16.xpose.msra.mxu0 %v113
  %132 = vmatprep.subr.bf16.mxu0 0
  %133 = vmatpush1.bf16.xpose.msra.mxu0 %v110
  %134 = vmatprep.subr.bf16.mxu0 0
  %135 = vmatpush1.bf16.xpose.msra.mxu0 %v107
  %136 = vmatprep.subr.bf16.mxu0 0
  %137 = vmatpush1.bf16.xpose.msra.mxu0 %v104
  %138 = vmatprep.subr.bf16.mxu0 0
  %139 = vmatpush1.bf16.xpose.msra.mxu0 %v101
  %140 = vmatprep.subr.bf16.mxu0 0
  %141 = vmatpush2.bf16.xpose.msra.mxu0 0
  %142 = vmatprep.subr.bf16.mxu0 0
  %143 = vmatpush2.bf16.xpose.msra.mxu0 0
  %144 = vmatprep.subr.bf16.mxu0 0
  %145 = vmatpush2.bf16.xpose.msra.mxu0 0
  %146 = vmatprep.subr.bf16.mxu0 0
  %147 = vmatpush2.bf16.xpose.msra.mxu0 0
  %148 = vmatprep.subr.bf16.mxu0 0
  %149 = vmatpush2.bf16.xpose.msra.mxu0 0
  %150 = vmatprep.subr.bf16.mxu0 0
  %151 = vmatpush2.bf16.xpose.msra.mxu0 0
  %152 = vmatprep.subr.bf16.mxu0 0
  %153 = vmatpush2.bf16.xpose.msra.mxu0 0
  %154 = vmatprep.subr.bf16.mxu0 0
  %155 = vmatpush2.bf16.xpose.msra.mxu0 0
  %156 = vmatprep.mubr.bf16.mxu0 0
  %157 = vmatmul.mubr.bf16.gmra.mxu0 %v95
  %v158 = vpop.f32.mrf.mxu0
  %v159 = vadd.f32 %v66, %v158
  %v160 = vpop.f32.mrf.mxu0
  %v161 = vpop.f32.mrf.mxu0
  %v162 = vadd.f32 %v71, %v161
  %v163 = vpop.f32.mrf.mxu0
  %164 = vmatprep.mubr.bf16.mxu0 0
  %165 = vmatmul.mubr.bf16.gmra.mxu0 %v98
  %v166 = vpop.f32.mrf.mxu0
  %v167 = vadd.f32 %v76, %v166
  %v168 = vpop.f32.mrf.mxu0
  %v169 = vpop.f32.mrf.mxu0
  %v170 = vadd.f32 %v81, %v169
  %v171 = vpop.f32.mrf.mxu0
  %172 = vdwg.mxu0
  %v173 = vmax.f32 %v159, 0.0
  %v174 = vmax.f32 %v162, 0.0
  %v175 = vmax.f32 %v167, 0.0
  %v176 = vmax.f32 %v170, 0.0
  %v177 = vld [vmem:[%s4] sm:$0xf]
  %v178 = vld [vmem:[%s4 + $0x4] sm:$0xf]
  %v179 = vld [vmem:[%s4 + $0x8] sm:$0xf]
  %v180 = vld [vmem:[%s4 + $0xc] sm:$0xf]
  %v181 = vpack.c.bf16 %v174, %v173
  %v182 = vpack.c.bf16 %v176, %v175
  %v183 = vld [vmem:[%s5] sm:$0xff]
  %v184 = vld [vmem:[%s5 + $0x8] sm:$0xff]
  %v185 = vld [vmem:[%s5 + $0x10] sm:$0xff]
  %v186 = vld [vmem:[%s5 + $0x18] sm:$0xff]
  %188 = vset.pattern.permute.xlu0 0
  %189 = vperm.xlu0 %188, %v183
  %v190 = vpop.permute.xlu0 %189
  %193 = vset.pattern.permute.xlu0 0
  %194 = vperm.xlu0 %193, %v184
  %v195 = vpop.permute.xlu0 %194
  %198 = vset.pattern.permute.xlu0 0
  %199 = vperm.xlu0 %198, %v185
  %v200 = vpop.permute.xlu0 %199
  %203 = vset.pattern.permute.xlu0 0
  %204 = vperm.xlu0 %203, %v186
  %v205 = vpop.permute.xlu0 %204
  %v211 = vunpack.c.l.b16 %v177
  %v212 = vunpack.c.l.b16 %v178
  %v213 = vunpack.c.l.b16 %v179
  %v214 = vunpack.c.l.b16 %v180
  %v215 = vpack.c.b16 %v212, %v211
  %v216 = vpack.c.b16 %v214, %v213
  %vm217 = vcmask 261120
  %v219 = vsel %vm217, %v215, 0
  %v222 = vsel %vm217, %v216, 0
  %224 = vmatprep.subr.bf16.mxu0 0
  %225 = vmatpush1.bf16.msra.mxu0 0
  %226 = vmatprep.subr.bf16.mxu0 0
  %227 = vmatpush1.bf16.msra.mxu0 0
  %228 = vmatprep.subr.bf16.mxu0 0
  %229 = vmatpush1.bf16.msra.mxu0 0
  %230 = vmatprep.subr.bf16.mxu0 0
  %231 = vmatpush1.bf16.msra.mxu0 0
  %232 = vmatprep.subr.bf16.mxu0 0
  %233 = vmatpush1.bf16.msra.mxu0 0
  %234 = vmatprep.subr.bf16.mxu0 0
  %235 = vmatpush1.bf16.msra.mxu0 0
  %236 = vmatprep.subr.bf16.mxu0 0
  %237 = vmatpush1.bf16.msra.mxu0 %v182
  %238 = vmatprep.subr.bf16.mxu0 0
  %239 = vmatpush1.bf16.msra.mxu0 %v181
  %240 = vmatprep.subr.bf16.mxu0 0
  %241 = vmatpush2.bf16.msra.mxu0 0
  %242 = vmatprep.subr.bf16.mxu0 0
  %243 = vmatpush2.bf16.msra.mxu0 0
  %244 = vmatprep.subr.bf16.mxu0 0
  %245 = vmatpush2.bf16.msra.mxu0 0
  %246 = vmatprep.subr.bf16.mxu0 0
  %247 = vmatpush2.bf16.msra.mxu0 0
  %248 = vmatprep.subr.bf16.mxu0 0
  %249 = vmatpush2.bf16.msra.mxu0 0
  %250 = vmatprep.subr.bf16.mxu0 0
  %251 = vmatpush2.bf16.msra.mxu0 0
  %252 = vmatprep.subr.bf16.mxu0 0
  %253 = vmatpush2.bf16.msra.mxu0 0
  %254 = vmatprep.subr.bf16.mxu0 0
  %255 = vmatpush2.bf16.msra.mxu0 0
  %256 = vmatprep.mubr.bf16.mxu0 0
  %257 = vmatmul.mubr.bf16.gmra.mxu0 %v219
  %v258 = vpop.f32.mrf.mxu0
  %v259 = vadd.f32 %v190, %v258
  %v260 = vpop.f32.mrf.mxu0
  %v261 = vpop.f32.mrf.mxu0
  %v262 = vadd.f32 %v195, %v261
  %v263 = vpop.f32.mrf.mxu0
  %264 = vmatprep.mubr.bf16.mxu0 0
  %265 = vmatmul.mubr.bf16.gmra.mxu0 %v222
  %v266 = vpop.f32.mrf.mxu0
  %v267 = vadd.f32 %v200, %v266
  %v268 = vpop.f32.mrf.mxu0
  %v269 = vpop.f32.mrf.mxu0
  %v270 = vadd.f32 %v205, %v269
  %v271 = vpop.f32.mrf.mxu0
  %272 = vdwg.mxu0
  %v273 = vmax.f32 %v259, 0.0
  %v274 = vmax.f32 %v262, 0.0
  %v275 = vmax.f32 %v267, 0.0
  %v276 = vmax.f32 %v270, 0.0
  %v277 = vld [vmem:[%s6] sm:$0xf]
  %v278 = vpack.c.bf16 %v274, %v273
  %v279 = vpack.c.bf16 %v276, %v275
  %v280 = vld [vmem:[%s7] sm:$0xff]
  %282 = vset.pattern.permute.xlu0 0
  %283 = vperm.xlu0 %282, %v280
  %v284 = vpop.permute.xlu0 %283
  %v287 = vsel %vm217, %v277, 0
  %289 = vmatprep.subr.bf16.mxu0 0
  %290 = vmatpush1.bf16.msra.mxu0 0
  %291 = vmatprep.subr.bf16.mxu0 0
  %292 = vmatpush1.bf16.msra.mxu0 0
  %293 = vmatprep.subr.bf16.mxu0 0
  %294 = vmatpush1.bf16.msra.mxu0 0
  %295 = vmatprep.subr.bf16.mxu0 0
  %296 = vmatpush1.bf16.msra.mxu0 0
  %297 = vmatprep.subr.bf16.mxu0 0
  %298 = vmatpush1.bf16.msra.mxu0 0
  %299 = vmatprep.subr.bf16.mxu0 0
  %300 = vmatpush1.bf16.msra.mxu0 0
  %301 = vmatprep.subr.bf16.mxu0 0
  %302 = vmatpush1.bf16.msra.mxu0 %v279
  %303 = vmatprep.subr.bf16.mxu0 0
  %304 = vmatpush1.bf16.msra.mxu0 %v278
  %305 = vmatprep.subr.bf16.mxu0 0
  %306 = vmatpush2.bf16.msra.mxu0 0
  %307 = vmatprep.subr.bf16.mxu0 0
  %308 = vmatpush2.bf16.msra.mxu0 0
  %309 = vmatprep.subr.bf16.mxu0 0
  %310 = vmatpush2.bf16.msra.mxu0 0
  %311 = vmatprep.subr.bf16.mxu0 0
  %312 = vmatpush2.bf16.msra.mxu0 0
  %313 = vmatprep.subr.bf16.mxu0 0
  %314 = vmatpush2.bf16.msra.mxu0 0
  %315 = vmatprep.subr.bf16.mxu0 0
  %316 = vmatpush2.bf16.msra.mxu0 0
  %317 = vmatprep.subr.bf16.mxu0 0
  %318 = vmatpush2.bf16.msra.mxu0 0
  %319 = vmatprep.subr.bf16.mxu0 0
  %320 = vmatpush2.bf16.msra.mxu0 0
  %321 = vmatprep.mubr.bf16.mxu0 0
  %322 = vmatmul.mubr.bf16.gmra.mxu0 %v287
  %v323 = vpop.f32.mrf.mxu0
  %v324 = vadd.f32 %v284, %v323
  %v325 = vpop.f32.mrf.mxu0
  %v326 = vpop.f32.mrf.mxu0
  %v327 = vpop.f32.mrf.mxu0
  %328 = vdwg.mxu0
  %s329 = sld [smem:[#allocation2]]
  %v330 = vtanh.pop %v324
  %v331 = vstv %s329
  %v332 = vmul.f32 %v331, %v330
  %333 = vst [vmem:[%s8] sm:$0xff] %v332
  // Predicated region
  $region34: #{tpu_custom_call.1} parent=0 // pred_check
    _
  $region35: #{tpu_custom_call.1} parent=0 // pred_check_branch
    %335 = sbr.rel (0) target = $region37
  $region36: #{tpu_custom_call.1} parent=0 // pred_region
    _
  $region37: #{tpu_custom_call.1} parent=0 // pred_fallthru
    _
  // Predicated region
  $region38: #{tpu_custom_call.1} parent=0 // pred_check
    _
  $region39: #{tpu_custom_call.1} parent=0 // pred_check_branch
    %337 = sbr.rel (0) target = $region41
  $region40: #{tpu_custom_call.1} parent=0 // pred_region
    _
  $region41: #{tpu_custom_call.1} parent=0 // pred_fallthru
    _

</llo_original>
